<compile_context>
chip_gen: v7x
topology: tpu7x:2x2x1
jax: 0.10.0
libtpu: 0.0.40
codegen_flags: <defaults>
</compile_context>

<pallas_src>
import jax
import jax.numpy as jnp
from jax.experimental import pallas as pl
from jax.experimental.pallas import tpu as pltpu

D = 64       # feature dim, hard-coded by the module's `sim.repeat(1, 1, 64)`
LANES = 128  # vreg lane width; the D=64 minor dim pads to this in VMEM


def ws_readout_kernel(seq_ref, q_ref, o_ref):
    # seq_ref: (TB, N, D)   q_ref: (TB, D)   o_ref: (TB, D)
    seq = seq_ref[...]
    # Upcast only the tiny query; the seq*q product is then computed in f32
    # via promotion (exact f32 scores even for bf16 seq).
    q = q_ref[...].astype(jnp.float32)

    # scores[b, n] = <seq[b, n, :], q[b, :]>  — VPU multiply + lane reduce.
    scores = jnp.sum(seq * q[:, None, :], axis=-1)      # (TB, N), f32, lane-dense

    # Softmax over the sequence axis (torch dim=1), kept unnormalized here.
    m = jnp.max(scores, axis=-1, keepdims=True)          # (TB, 1)
    e = jnp.exp(scores - m)                               # (TB, N)
    denom = jnp.sum(e, axis=-1, keepdims=True)            # (TB, 1)

    # out = sum_n seq * softmax(scores) == (sum_n seq * e) / denom.
    # The e-weights broadcast over the D features (== torch repeat(1, 1, 64));
    # products/accumulation are f32 via promotion.  Normalization touches only
    # the (TB, D) result, so it is exact (no approx reciprocal needed).
    out_unnorm = jnp.sum(seq * e[:, :, None], axis=1)     # (TB, D), f32
    o_ref[...] = (out_unnorm / denom).astype(o_ref.dtype)


def _vmem_limit_bytes():
    """Generation-aware scoped-VMEM limit: half of physical VMEM, capped."""
    cap = 64 << 20  # conservative default (v7x per-TensorCore VMEM)
    try:
        cap = int(getattr(pltpu.get_tpu_info(), "vmem_capacity_bytes", cap))
    except Exception:
        pass
    # v7x (64 MiB physical) -> 32 MiB scoped; v5e/v6e (128 MiB) -> 64 MiB.
    return max(16 << 20, min(cap // 2, 64 << 20))


def _choose_tb(batch, seq_len, itemsize, vmem_limit):
    """Pick the batch tile TB.

    TB is a multiple of 8 (or the full batch) so the (TB, D) output block
    satisfies the (8, 128) constraint.  Sizing uses the PADDED seq-tile
    footprint (D=64 pads to 128 lanes in VMEM): double-buffered input tiles
    plus the kernel's f32 seq-sized temporaries must fit the scoped-VMEM
    limit with slack.  When the batch permits, >= 4 grid steps are kept so
    each TensorCore pipelines at least two DMAs against compute.
    """
    per_batch_padded = max(1, seq_len * LANES * itemsize)
    budget = vmem_limit // 6   # ~2x double-buffered seq + ~2x f32 temps + slack
    tb = max(1, budget // per_batch_padded)

    if batch >= 16:
        min_steps = min(4, batch // 8)   # >= 2 steps per v7x TensorCore when possible
        tb = min(tb, batch // min_steps)

    if tb >= batch:
        return batch
    if tb >= 8:
        return (tb // 8) * 8
    # Very long sequences collapse TB to the smallest sublane-friendly block.
    # TODO(synk): stream N in chunks with online-softmax accumulation (inner
    # pl.loop / second 'arbitrary' grid axis) so TB can stay large for big N.
    return min(batch, 8)


def ws_readout(seq, query):
    B, N, d = seq.shape
    assert d == D, "WSReadout hard-codes a feature dim of 64"
    assert query.shape == (B, 1, D)

    q2d = query.reshape(B, D)  # drop the size-1 middle dim (free metadata reshape)

    vmem_limit = _vmem_limit_bytes()
    tb = _choose_tb(B, N, seq.dtype.itemsize, vmem_limit)
    grid = (pl.cdiv(B, tb),)

    # TODO(synk): for full 128-lane utilization, view seq as (B, N//2, 128) with
    # a tiled [q|q] query and do a segmented per-64-lane-half score reduce;
    # skipped here for lowering robustness (kernel is HBM-bound for f32 inputs).
    return pl.pallas_call(
        ws_readout_kernel,
        out_shape=jax.ShapeDtypeStruct((B, D), seq.dtype),
        grid_spec=pltpu.PrefetchScalarGridSpec(
            num_scalar_prefetch=0,
            grid=grid,
            in_specs=[
                pl.BlockSpec((tb, N, D), lambda b: (b, 0, 0)),
                pl.BlockSpec((tb, D), lambda b: (b, 0)),
            ],
            out_specs=pl.BlockSpec((tb, D), lambda b: (b, 0)),
        ),
        compiler_params=pltpu.CompilerParams(
            dimension_semantics=("parallel",),
            vmem_limit_bytes=vmem_limit,
        ),
    )(seq, q2d)


def ws_readout_ref(seq, query):
    # Pure-JAX reference mirroring the PyTorch forward.
    sim = jnp.einsum("bnd,bqd->bnq", seq, query)   # (B, N, 1)
    sim = jax.nn.softmax(sim, axis=1)
    return jnp.sum(seq * sim, axis=1)              # (B, D)


if __name__ == "__main__":
    # Primary small-shape check (consistent with the module: B=2, N=8, D=64).
    k1, k2 = jax.random.split(jax.random.PRNGKey(0))
    B, N = 2, 8
    seq = jax.random.normal(k1, (B, N, D), dtype=jnp.float32)
    query = jax.random.normal(k2, (B, 1, D), dtype=jnp.float32)

    out = ws_readout(seq, query)
    jax.block_until_ready(out)
    ref = ws_readout_ref(seq, query)
    assert out.shape == (B, D)
    # Exact (non-approx) normalization restores tight f32 accuracy.
    assert jnp.allclose(out, ref, atol=1e-5, rtol=1e-5), float(
        jnp.max(jnp.abs(out - ref)))

    # Secondary check exercising a multi-step (pipelined) batch grid.
    k3, k4 = jax.random.split(jax.random.PRNGKey(1))
    B2, N2 = 32, 256
    seq2 = jax.random.normal(k3, (B2, N2, D), dtype=jnp.float32)
    query2 = jax.random.normal(k4, (B2, 1, D), dtype=jnp.float32)
    out2 = ws_readout(seq2, query2)
    jax.block_until_ready(out2)
    ref2 = ws_readout_ref(seq2, query2)
    assert jnp.allclose(out2, ref2, atol=1e-4, rtol=1e-4), float(
        jnp.max(jnp.abs(out2 - ref2)))

    print("KERNEL_OK")
</pallas_src>

<mosaic_0001>
module attributes {stable_mosaic.version = 11 : i64} {
  func.func @ws_readout_kernel(%arg0: i32, %arg1: memref<2x8x64xf32, #tpu.memory_space<vmem>>, %arg2: memref<2x64xf32, #tpu.memory_space<vmem>>, %arg3: memref<2x64xf32, #tpu.memory_space<vmem>>) attributes {dimension_semantics = [#tpu.dimension_semantics<parallel>], iteration_bounds = array<i64: 1>, scalar_prefetch = 0 : i64, scratch_operands = 0 : i64, tpu.core_type = #tpu.core_type<tc>, window_params = [{transform_indices = @transform_0, window_bounds = array<i64: 2, 8, 64>}, {transform_indices = @transform_1, window_bounds = array<i64: 2, 64>}, {transform_indices = @transform_2, window_bounds = array<i64: 2, 64>}]} {
    %c0 = arith.constant 0 : index
    %c0_0 = arith.constant 0 : index
    %c0_1 = arith.constant 0 : index
    %0 = vector.load %arg1[%c0, %c0_0, %c0_1] : memref<2x8x64xf32, #tpu.memory_space<vmem>>, vector<2x8x64xf32>
    %c0_2 = arith.constant 0 : index
    %c0_3 = arith.constant 0 : index
    %1 = vector.load %arg2[%c0_2, %c0_3] : memref<2x64xf32, #tpu.memory_space<vmem>>, vector<2x64xf32>
    %2 = vector.shape_cast %1 : vector<2x64xf32> to vector<2x1x64xf32>
    %3 = vector.broadcast %2 : vector<2x1x64xf32> to vector<2x8x64xf32>
    %4 = arith.mulf %0, %3 : vector<2x8x64xf32>
    %cst = arith.constant dense<0.000000e+00> : vector<2x8xf32>
    %5 = vector.multi_reduction <add>, %4, %cst [2] : vector<2x8x64xf32> to vector<2x8xf32>
    %cst_4 = arith.constant dense<0xFF800000> : vector<2xf32>
    %6 = vector.multi_reduction <maximumf>, %5, %cst_4 [1] : vector<2x8xf32> to vector<2xf32>
    %7 = vector.shape_cast %6 : vector<2xf32> to vector<2x1xf32>
    %8 = vector.broadcast %7 : vector<2x1xf32> to vector<2x8xf32>
    %9 = arith.subf %5, %8 : vector<2x8xf32>
    %10 = math.exp %9 : vector<2x8xf32>
    %cst_5 = arith.constant dense<0.000000e+00> : vector<2xf32>
    %11 = vector.multi_reduction <add>, %10, %cst_5 [1] : vector<2x8xf32> to vector<2xf32>
    %12 = vector.shape_cast %11 : vector<2xf32> to vector<2x1xf32>
    %13 = vector.shape_cast %10 : vector<2x8xf32> to vector<2x8x1xf32>
    %14 = vector.broadcast %13 : vector<2x8x1xf32> to vector<2x8x64xf32>
    %15 = arith.mulf %0, %14 : vector<2x8x64xf32>
    %cst_6 = arith.constant dense<0.000000e+00> : vector<2x64xf32>
    %16 = vector.multi_reduction <add>, %15, %cst_6 [1] : vector<2x8x64xf32> to vector<2x64xf32>
    %17 = vector.broadcast %12 : vector<2x1xf32> to vector<2x64xf32>
    %18 = arith.divf %16, %17 : vector<2x64xf32>
    %c0_7 = arith.constant 0 : index
    %c0_8 = arith.constant 0 : index
    %19 = vector.load %arg3[%c0_7, %c0_8] : memref<2x64xf32, #tpu.memory_space<vmem>>, vector<2x64xf32>
    tpu.vector_store %arg3[%c0_7, %c0_8], %18 {strides = array<i32>} : memref<2x64xf32, #tpu.memory_space<vmem>>, vector<2x64xf32>,
    return
  }
  func.func @transform_0(%arg0: i32) -> (i32, i32, i32) {
    %c0_i32 = arith.constant 0 : i32
    %c0_i32_0 = arith.constant 0 : i32
    %c0_i32_1 = arith.constant 0 : i32
    return %arg0, %c0_i32, %c0_i32_0 : i32, i32, i32
  }
  func.func @transform_1(%arg0: i32) -> (i32, i32) {
    %c0_i32 = arith.constant 0 : i32
    %c0_i32_0 = arith.constant 0 : i32
    return %arg0, %c0_i32 : i32, i32
  }
  func.func @transform_2(%arg0: i32) -> (i32, i32) {
    %c0_i32 = arith.constant 0 : i32
    %c0_i32_0 = arith.constant 0 : i32
    return %arg0, %c0_i32 : i32, i32
  }
}

</mosaic_0001>

<llo_original>
// kernel: tpu_custom_call.1
$region0: #{tpu_custom_call.1}
  #allocation0 [shape = 'u32[]', space=smem, size = 0x4, offset = 0x4, fixed_abs, tag = 'smem constant byte address 0x4 - core index']
  #allocation1 [shape = 'u32[144,128]{1,0:T(1,128)}', space=vmem, size = 0x12000, scoped, tag = 'internal scratch']
  %s0 = inlined_call_operand.hbm [shape: f32[2,8,64], index: 0, kind: input, shape index: {}]
  %s1 = inlined_call_operand.vmem [shape: f32[2,64], index: 1, kind: input, shape index: {}]
  %s2 = inlined_call_operand.hbm [shape: f32[2,64], index: 2, kind: output, shape index: {}]
  %s3 = sld [smem:[#allocation0]]
  $region22: #{tpu_custom_call.1} parent=0
    _
  %s5 = ssub.s32 1, %s3
  %s6 = scalar_select 0, %s5, %s3
  $region1: #{tpu_custom_call.1} parent=0
    #allocation2 [shape = 'u8[8192]{0}', space=vmem, size = 0x2000, scoped, tag = 'input window, operand 0, single buffered']
    #allocation3 [shape = 's32[1]{0}', space=sflag, size = 0x4, scoped, tag = 'scoped memory for tpu_custom_call.1']
    #allocation4 [shape = 's32[1]{0}', space=sflag, size = 0x4, scoped, tag = 'scoped memory for tpu_custom_call.1']
    #allocation5 [shape = 'u8[1024]{0}', space=vmem, size = 0x400, scoped, tag = 'output window, operand 0, single buffered']
    %7 = vsyncpa [#allocation3], 0
    %8 = vsyncpa [#allocation4], 0
    // Predicated region
    $region2: #{tpu_custom_call.1} parent=1 // pred_check
      _
    $region3: #{tpu_custom_call.1} parent=1 // pred_check_branch
      %10 = sbr.rel (0) target = $region5
    $region4: #{tpu_custom_call.1} parent=1 // pred_region
      %s12 = ssub.s32 256, 256
      %13 = vsyncadd [#allocation3], %s12
      %s14 = sshll.u32 [#allocation2], 4
      %s15 = int_to_ptr.vmem [resolvable:$true] %s14
      %20 = dma.hbm_to_vmem [thread:$0]  %s0, 256, %s15, [#allocation3], 128, 128, 8
    $region5: #{tpu_custom_call.1} parent=1 // pred_fallthru
      _
    // Predicated region
    $region6: #{tpu_custom_call.1} parent=1 // pred_check
      _
    $region7: #{tpu_custom_call.1} parent=1 // pred_check_branch
      %22 = sbr.rel (0) target = $region9
    $region8: #{tpu_custom_call.1} parent=1 // pred_region
      _
    $region9: #{tpu_custom_call.1} parent=1 // pred_fallthru
      _
    // Predicated region
    $region10: #{tpu_custom_call.1} parent=1 // pred_check
      _
    $region11: #{tpu_custom_call.1} parent=1 // pred_check_branch
      %24 = sbr.rel (0) target = $region13
    $region12: #{tpu_custom_call.1} parent=1 // pred_region
      %25 = dma.done [#allocation3], 256
    $region13: #{tpu_custom_call.1} parent=1 // pred_fallthru
      _
    %v26 = vld [vmem:[#allocation2] sm:$0xff]
    %v27 = vld [vmem:[#allocation2 + $0x8] sm:$0xff]
    %v28 = vld [vmem:[%s1] sm:$0x3]
    %v31 = vunpack.c.l.s4 1966171168
    %v32 = vunpack.c.0.s8 %v31
    %v33 = vlaneseq
    %v34 = vshrl.u32 %v33, 7
    %v35 = vsub.s32 %v32, %v34
    %v36 = vrot.slane %v28, %v35
    %v37 = vcombine.high %v36, %v36
    %v39 = vunpack.c.l.s4 1966171168
    %v40 = vunpack.c.0.s8 %v39
    %v41 = vlaneseq
    %v42 = vshrl.u32 %v41, 7
    %v43 = vsub.s32 %v40, %v42
    %v44 = vrot.slane %v36, %v43
    %v46 = vunpack.c.l.s4 1966171168
    %v47 = vunpack.c.0.s8 %v46
    %v48 = vlaneseq
    %v49 = vshrl.u32 %v48, 7
    %v50 = vsub.s32 %v47, %v49
    %v51 = vrot.slane %v37, %v50
    %v52 = vlaneseq
    %v53 = vshrl.u32 %v52, 7
    %v54 = vsub.s32 0, %v53
    %v55 = vrot.slane %v44, %v54
    %v56 = vlaneseq
    %v57 = vshrl.u32 %v56, 7
    %v58 = vsub.s32 0, %v57
    %v59 = vrot.slane %v51, %v58
    %v62 = vmul.f32 %v26, %v55
    %v63 = vmul.f32 %v27, %v59
    %vm64 = vcmask 523264
    %v65 = vsel %vm64, %v62, 0.0
    %66 = vadd.xlane.f32.xlu0 %v65
    %v67 = vpop.xlane.xlu0 %66
    %v68 = vsel %vm64, %v63, 0.0
    %69 = vadd.xlane.f32.xlu0 %v68
    %v70 = vpop.xlane.xlu0 %69
    %v73 = vlaneseq
    %v74 = vand.u32 %v73, 127
    %v75 = vlaneseq
    %v76 = vshrl.u32 %v75, 7
    %v77 = vsub.s32 %v74, %v76
    %v78 = vrot.slane %v67, %v77
    %v79 = vlaneseq
    %v80 = vshrl.u32 %v79, 7
    %v81 = vsub.s32 %v74, %v80
    %v82 = vrot.slane %v70, %v81
    %vm83 = vcmask 1041409
    %v84 = vsel %vm83, %v82, %v78
    %vm86 = vcmask 58368
    %v87 = vsel %vm86, %v84, -inf
    %88 = vmax.xlane.f32.xlu0 %v87
    %v89 = vpop.xlane.xlu0 %88
    %v91 = vlaneseq
    %v92 = vshrl.u32 %v91, 7
    %v93 = vsub.s32 0, %v92
    %v94 = vrot.slane %v89, %v93
    %v95 = vlaneseq
    %v96 = vshrl.u32 %v95, 7
    %v97 = vsub.s32 1, %v96
    %v98 = vrot.slane %v89, %v97
    %v101 = vsub.f32 %v67, %v94
    %v102 = vsub.f32 %v70, %v98
    %v103 = vmul.f32 %v101, 1.442695
    %v104 = vpow.pop %v103
    %v105 = vmul.f32 %v102, 1.442695
    %v106 = vpow.pop %v105
    %109 = vset.pattern.permute.xlu0 0
    %110 = vperm.xlu0 %109, %v104
    %v111 = vpop.permute.xlu0 %110
    %112 = vset.pattern.permute.xlu0 0
    %113 = vperm.xlu0 %112, %v106
    %v114 = vpop.permute.xlu0 %113
    %v115 = vlaneseq
    %v116 = vshrl.u32 %v115, 7
    %v117 = vsub.s32 %v74, %v116
    %v118 = vrot.slane %v111, %v117
    %v119 = vlaneseq
    %v120 = vshrl.u32 %v119, 7
    %v121 = vsub.s32 %v74, %v120
    %v122 = vrot.slane %v114, %v121
    %v123 = vsel %vm83, %v122, %v118
    %v125 = vsel %vm86, %v123, 0.0
    %126 = vadd.xlane.f32.xlu0 %v125
    %v127 = vpop.xlane.xlu0 %126
    %v130 = vmul.f32 %v26, %v111
    %v131 = vmul.f32 %v27, %v114
    %v132 = vsel %vm64, %v130, 0.0
    %v133 = vrot.slane %v132, 4
    %v134 = vadd.f32 %v132, %v133
    %v135 = vrot.slane %v134, 2
    %v136 = vadd.f32 %v134, %v135
    %v137 = vrot.slane %v136, 1
    %v138 = vadd.f32 %v136, %v137
    %v139 = vsel %vm64, %v131, 0.0
    %v140 = vrot.slane %v139, 4
    %v141 = vadd.f32 %v139, %v140
    %v142 = vrot.slane %v141, 2
    %v143 = vadd.f32 %v141, %v142
    %v144 = vrot.slane %v143, 1
    %v145 = vadd.f32 %v143, %v144
    %v147 = vrot.slane %v127, 1
    %v150 = vrcp.pop %v127
    %v151 = vmul.f32 %v138, %v150
    %v152 = vrcp.pop %v147
    %v153 = vmul.f32 %v145, %v152
    %v156 = vrot.slane %v153, 7
    %v157 = vsel %vm83, %v156, %v151
    %vm159 = vcmask 517120
    %160 = vst.msk [vmem:[#allocation5] sm:$0x3] %vm159, %v157
    // Predicated region
    $region14: #{tpu_custom_call.1} parent=1 // pred_check
      _
    $region15: #{tpu_custom_call.1} parent=1 // pred_check_branch
      %162 = sbr.rel (0) target = $region17
    $region16: #{tpu_custom_call.1} parent=1 // pred_region
      %s164 = ssub.s32 32, 32
      %165 = vsyncadd [#allocation4], %s164
      %s167 = sshll.u32 [#allocation5], 4
      %s168 = int_to_ptr.vmem [resolvable:$true] %s167
      %170 = dma.vmem_to_hbm [thread:$0]  %s168, 32, %s2, [#allocation4]
    $region17: #{tpu_custom_call.1} parent=1 // pred_fallthru
      _
    // Predicated region
    $region18: #{tpu_custom_call.1} parent=1 // pred_check
      _
    $region19: #{tpu_custom_call.1} parent=1 // pred_check_branch
      %172 = sbr.rel (0) target = $region21
    $region20: #{tpu_custom_call.1} parent=1 // pred_region
      %173 = dma.done [#allocation4], 32
    $region21: #{tpu_custom_call.1} parent=1 // pred_fallthru
      _
    %174 = vsyncpa [#allocation3], 1
    %175 = vsyncpa [#allocation4], 1

</llo_original>
